<compile_context>
chip_gen: v7x
topology: tpu7x:2x2x1
jax: 0.10.0
libtpu: 0.0.40
codegen_flags: <defaults>
</compile_context>

<pallas_src>
import functools

import jax
import jax.numpy as jnp
from jax.experimental import pallas as pl
from jax.experimental.pallas import tpu as pltpu

_EPS = 1e-5  # PyTorch BatchNorm default eps


# --------------------------------------------------------------------------
# Generation-aware VMEM limit
# --------------------------------------------------------------------------
@functools.lru_cache(maxsize=None)
def _vmem_limit_bytes():
    try:
        cap = int(pltpu.get_tpu_info().vmem_capacity_bytes)
    except Exception:
        # Safe on every generation (v7x has 64 MiB per TensorCore).
        return 48 * 1024 * 1024
    return min(96 * 1024 * 1024, (cap * 3) // 4)


# --------------------------------------------------------------------------
# Kernels
# --------------------------------------------------------------------------
def _linear_bn_relu_kernel(x_ref, w_ref, g_ref, b_ref, o_ref, *, eps):
    # x: (N, Din), w: (Din, F) with columns already permuted to (h, w, c) order
    y = jnp.dot(x_ref[...], w_ref[...], preferred_element_type=jnp.float32)
    n = y.shape[0]
    # BatchNorm1d (training mode): one-pass biased stats over the batch axis.
    s = jnp.sum(y, axis=0, keepdims=True)
    q = jnp.sum(y * y, axis=0, keepdims=True)
    mean = s / n
    var = jnp.maximum(q / n - mean * mean, 0.0)
    scale = g_ref[...] * jax.lax.rsqrt(var + eps)
    shift = b_ref[...] - mean * scale
    o_ref[...] = jnp.maximum(y * scale + shift, 0.0)


def _convt_bn_relu_kernel(x_ref, we_ref, wo_ref, g_ref, b_ref, o_ref, xp_ref,
                          *, eps):
    # x: (N, H, W, Cin) NHWC (undilated).  we: (3, 3*Cin, 2*Cout)  (even rows)
    # wo: (2, 3*Cin, 2*Cout) (odd rows).  Output block: (N, H, 2, W, 2*Cout)
    # where the last dim is packed (col-parity, channel).
    N, H, W, Cin = x_ref.shape
    Cout2 = o_ref.shape[-1]
    Cout = Cout2 // 2
    M = N * H * W

    # 1-pixel zero halo in VMEM scratch (replaces the 4x zero-dilated tensor).
    xp_ref[...] = jnp.zeros(xp_ref.shape, xp_ref.dtype)
    xp_ref[:, 1:H + 1, 1:W + 1, :] = x_ref[...]

    acc_e = jnp.zeros((M, Cout2), jnp.float32)   # even output rows
    acc_o = jnp.zeros((M, Cout2), jnp.float32)   # odd output rows
    for dr in range(3):
        # Fold the 3 column taps into the contraction dim (im2col over dc):
        # one matmul of (M, 3*Cin) x (3*Cin, 2*Cout) per row tap.
        patch = jnp.concatenate(
            [xp_ref[:, dr:dr + H, dc:dc + W, :] for dc in range(3)],
            axis=-1).reshape(M, 3 * Cin)
        acc_e = acc_e + jnp.dot(patch, we_ref[dr],
                                preferred_element_type=jnp.float32)
        if dr >= 1:  # odd output rows only use the two lower row taps
            acc_o = acc_o + jnp.dot(patch, wo_ref[dr - 1],
                                    preferred_element_type=jnp.float32)

    # BatchNorm2d (training mode, biased variance): one-pass sum / sum-of-sq
    # over all N * 2H * 2W positions, folding the two packed column parities.
    cnt = float(4 * M)
    s = jnp.sum(acc_e, axis=0, keepdims=True) + jnp.sum(acc_o, axis=0, keepdims=True)
    q = (jnp.sum(acc_e * acc_e, axis=0, keepdims=True)
         + jnp.sum(acc_o * acc_o, axis=0, keepdims=True))
    s_c = s[:, :Cout] + s[:, Cout:]
    q_c = q[:, :Cout] + q[:, Cout:]
    mean = s_c / cnt
    var = jnp.maximum(q_c / cnt - mean * mean, 0.0)
    scale = g_ref[...] * jax.lax.rsqrt(var + eps)
    shift = b_ref[...] - mean * scale
    scale2 = jnp.concatenate([scale, scale], axis=-1)
    shift2 = jnp.concatenate([shift, shift], axis=-1)

    y_e = jnp.maximum(acc_e * scale2 + shift2, 0.0)
    y_o = jnp.maximum(acc_o * scale2 + shift2, 0.0)
    o_ref[:, :, 0:1, :, :] = y_e.reshape(N, H, 1, W, Cout2)
    o_ref[:, :, 1:2, :, :] = y_o.reshape(N, H, 1, W, Cout2)


def _convt_bias_sigmoid_kernel(x_ref, we_ref, wo_ref, b_ref, o_ref, xp_ref):
    # Per-batch-element program.  x: (1, H, W, Cin); out: (1, H, 2, W, 6).
    _, H, W, Cin = x_ref.shape
    Cout2 = o_ref.shape[-1]
    M = H * W

    xp_ref[...] = jnp.zeros(xp_ref.shape, xp_ref.dtype)
    xp_ref[:, 1:H + 1, 1:W + 1, :] = x_ref[...]

    acc_e = jnp.zeros((M, Cout2), jnp.float32)
    acc_o = jnp.zeros((M, Cout2), jnp.float32)
    for dr in range(3):
        patch = jnp.concatenate(
            [xp_ref[:, dr:dr + H, dc:dc + W, :] for dc in range(3)],
            axis=-1).reshape(M, 3 * Cin)
        acc_e = acc_e + jnp.dot(patch, we_ref[dr],
                                preferred_element_type=jnp.float32)
        if dr >= 1:
            acc_o = acc_o + jnp.dot(patch, wo_ref[dr - 1],
                                    preferred_element_type=jnp.float32)

    y_e = jax.nn.sigmoid(acc_e + b_ref[...])
    y_o = jax.nn.sigmoid(acc_o + b_ref[...])
    o_ref[:, :, 0:1, :, :] = y_e.reshape(1, H, 1, W, Cout2)
    o_ref[:, :, 1:2, :, :] = y_o.reshape(1, H, 1, W, Cout2)


# --------------------------------------------------------------------------
# pallas_call wrappers
# --------------------------------------------------------------------------
def linear_bn_relu(x, w, gamma, beta):
    N, Din = x.shape
    F = w.shape[1]
    kernel = functools.partial(_linear_bn_relu_kernel, eps=_EPS)
    return pl.pallas_call(
        kernel,
        out_shape=jax.ShapeDtypeStruct((N, F), jnp.float32),
        grid=(1,),
        in_specs=[
            pl.BlockSpec((N, Din), lambda i: (0, 0)),
            pl.BlockSpec((Din, F), lambda i: (0, 0)),
            pl.BlockSpec((1, F), lambda i: (0, 0)),
            pl.BlockSpec((1, F), lambda i: (0, 0)),
        ],
        out_specs=pl.BlockSpec((N, F), lambda i: (0, 0)),
        compiler_params=pltpu.CompilerParams(
            dimension_semantics=("arbitrary",),
            vmem_limit_bytes=_vmem_limit_bytes()),
    )(x, w, gamma, beta)


def convt_bn_relu(x_nhwc, w_e, w_o, gamma, beta):
    N, H, W, Cin = x_nhwc.shape
    Cout = gamma.shape[-1]
    kernel = functools.partial(_convt_bn_relu_kernel, eps=_EPS)
    out = pl.pallas_call(
        kernel,
        out_shape=jax.ShapeDtypeStruct((N, H, 2, W, 2 * Cout), jnp.float32),
        grid=(1,),
        in_specs=[
            pl.BlockSpec((N, H, W, Cin), lambda i: (0, 0, 0, 0)),
            pl.BlockSpec((3, 3 * Cin, 2 * Cout), lambda i: (0, 0, 0)),
            pl.BlockSpec((2, 3 * Cin, 2 * Cout), lambda i: (0, 0, 0)),
            pl.BlockSpec((1, Cout), lambda i: (0, 0)),
            pl.BlockSpec((1, Cout), lambda i: (0, 0)),
        ],
        out_specs=pl.BlockSpec((N, H, 2, W, 2 * Cout),
                               lambda i: (0, 0, 0, 0, 0)),
        scratch_shapes=[pltpu.VMEM((N, H + 2, W + 2, Cin), jnp.float32)],
        compiler_params=pltpu.CompilerParams(
            dimension_semantics=("arbitrary",),
            vmem_limit_bytes=_vmem_limit_bytes()),
    )(x_nhwc, w_e, w_o, gamma, beta)
    # (N, H, 2, W, 2*Cout) -> (N, 2H, 2W, Cout): contiguous, free.
    return out.reshape(N, 2 * H, 2 * W, Cout)


def convt_bias_sigmoid(x_nhwc, w_e, w_o, bias2):
    N, H, W, Cin = x_nhwc.shape
    Cout2 = bias2.shape[-1]            # 2 * 3
    out = pl.pallas_call(
        _convt_bias_sigmoid_kernel,
        out_shape=jax.ShapeDtypeStruct((N, H, 2, W, Cout2), jnp.float32),
        grid=(N,),
        in_specs=[
            pl.BlockSpec((1, H, W, Cin), lambda n: (n, 0, 0, 0)),
            pl.BlockSpec((3, 3 * Cin, Cout2), lambda n: (0, 0, 0)),
            pl.BlockSpec((2, 3 * Cin, Cout2), lambda n: (0, 0, 0)),
            pl.BlockSpec((1, Cout2), lambda n: (0, 0)),
        ],
        out_specs=pl.BlockSpec((1, H, 2, W, Cout2),
                               lambda n: (n, 0, 0, 0, 0)),
        scratch_shapes=[pltpu.VMEM((1, H + 2, W + 2, Cin), jnp.float32)],
        compiler_params=pltpu.CompilerParams(
            dimension_semantics=("parallel",),
            vmem_limit_bytes=_vmem_limit_bytes()),
    )(x_nhwc, w_e, w_o, bias2)
    return out.reshape(N, 2 * H, 2 * W, Cout2 // 2)


# --------------------------------------------------------------------------
# Parameter preparation (done ONCE) — parity weight packing, feature perm.
# --------------------------------------------------------------------------
def _prep_parity_weights(wt):
    """wt: PyTorch ConvTranspose2d weight (Cin, Cout, 5, 5).

    Returns (w_even_rows, w_odd_rows):
      w_e: (3, 3*Cin, 2*Cout)  row taps dr=0..2 (kh = 4 - 2*dr)
      w_o: (2, 3*Cin, 2*Cout)  row taps dr=1..2 (kh = 5 - 2*dr)
    Rows packed as (dc, ci); columns packed as (col-parity, co).  Even output
    columns use kw = 4 - 2*dc; odd output columns use kw = 5 - 2*dc (dc>=1).
    """
    def tap_block(kh):
        rows = []
        for dc in range(3):
            w_even = wt[:, :, kh, 4 - 2 * dc]                     # (Cin, Cout)
            w_odd = (jnp.zeros_like(w_even) if dc == 0
                     else wt[:, :, kh, 5 - 2 * dc])
            rows.append(jnp.concatenate([w_even, w_odd], axis=1))
        return jnp.concatenate(rows, axis=0)                      # (3Cin, 2Cout)

    w_e = jnp.stack([tap_block(4 - 2 * dr) for dr in range(3)], axis=0)
    w_o = jnp.stack([tap_block(5 - 2 * dr) for dr in (1, 2)], axis=0)
    return w_e, w_o


def prepare_params(raw):
    dim = raw["dim"]
    c8 = dim * 8
    feat = c8 * 16
    # Permute Linear output features from PyTorch (c, h, w) order to (h, w, c)
    # so the view to NHWC is a free reshape (no transpose between l1 and l2).
    h = jnp.arange(4).reshape(4, 1, 1)
    w = jnp.arange(4).reshape(1, 4, 1)
    c = jnp.arange(c8).reshape(1, 1, c8)
    perm = (c * 16 + h * 4 + w).reshape(-1)         # new position -> old feature

    p = {"dim": dim}
    p["l1_w"] = raw["l1_w"].T[:, perm]              # (Din, F)
    p["l1_gamma"] = raw["l1_gamma"][perm].reshape(1, feat)
    p["l1_beta"] = raw["l1_beta"][perm].reshape(1, feat)

    blocks = []
    for (wt, g, b) in raw["blocks"]:
        cout = wt.shape[1]
        we, wo = _prep_parity_weights(wt)
        blocks.append((we, wo, g.reshape(1, cout), b.reshape(1, cout)))
    p["blocks"] = blocks

    we, wo = _prep_parity_weights(raw["final_w"])
    p["final_we"], p["final_wo"] = we, wo
    p["final_b2"] = jnp.concatenate([raw["final_b"], raw["final_b"]]).reshape(1, 6)
    return p


def init_raw_params(key, in_dim, dim):
    """Synthetic parameters in PyTorch layouts."""
    keys = iter(jax.random.split(key, 16))
    feat = dim * 8 * 4 * 4
    p = {"dim": dim}
    p["l1_w"] = 0.05 * jax.random.normal(next(keys), (feat, in_dim), jnp.float32)
    p["l1_gamma"] = 1.0 + 0.1 * jax.random.normal(next(keys), (feat,), jnp.float32)
    p["l1_beta"] = 0.1 * jax.random.normal(next(keys), (feat,), jnp.float32)
    p["blocks"] = []
    for cin, cout in [(dim * 8, dim * 4), (dim * 4, dim * 2), (dim * 2, dim)]:
        wt = 0.05 * jax.random.normal(next(keys), (cin, cout, 5, 5), jnp.float32)
        g = 1.0 + 0.1 * jax.random.normal(next(keys), (cout,), jnp.float32)
        b = 0.1 * jax.random.normal(next(keys), (cout,), jnp.float32)
        p["blocks"].append((wt, g, b))
    p["final_w"] = 0.05 * jax.random.normal(next(keys), (dim, 3, 5, 5), jnp.float32)
    p["final_b"] = 0.1 * jax.random.normal(next(keys), (3,), jnp.float32)
    return p


# --------------------------------------------------------------------------
# Full forward pass
# --------------------------------------------------------------------------
def generator_forward(params, x):
    dim = params["dim"]
    n = x.shape[0]
    # l1: Linear -> BN1d -> ReLU (features already in (h, w, c) order)
    y = linear_bn_relu(x, params["l1_w"], params["l1_gamma"], params["l1_beta"])
    y = y.reshape(n, 4, 4, dim * 8)                 # NHWC, free reshape
    # three dconv_bn_relu blocks (parity-decomposed transposed conv)
    for (we, wo, g, b) in params["blocks"]:
        y = convt_bn_relu(y, we, wo, g, b)
    # final ConvTranspose2d(dim, 3) + bias + Sigmoid
    y = convt_bias_sigmoid(y, params["final_we"], params["final_wo"],
                           params["final_b2"])      # (N, 64, 64, 3)
    # back to PyTorch NCHW (single small transpose at the very end)
    return jnp.transpose(y, (0, 3, 1, 2))


if __name__ == "__main__":
    key = jax.random.PRNGKey(0)
    # small shapes consistent with the module: batch=2, in_dim=16, dim=8
    in_dim, dim, batch = 16, 8, 2
    params = prepare_params(init_raw_params(key, in_dim, dim))
    x = jax.random.normal(jax.random.fold_in(key, 1234), (batch, in_dim),
                          jnp.float32)
    out = generator_forward(params, x)
    out = jax.block_until_ready(out)
    assert out.shape == (batch, 3, 64, 64), out.shape
    assert bool(jnp.all(jnp.isfinite(out)))
    assert bool(jnp.all((out >= 0.0) & (out <= 1.0)))  # sigmoid output range
    print("KERNEL_OK")
</pallas_src>

<mosaic_0001>
module attributes {stable_mosaic.version = 11 : i64} {
  func.func @_linear_bn_relu_kernel(%arg0: i32, %arg1: memref<2x16xf32, #tpu.memory_space<vmem>>, %arg2: memref<16x1024xf32, #tpu.memory_space<vmem>>, %arg3: memref<1x1024xf32, #tpu.memory_space<vmem>>, %arg4: memref<1x1024xf32, #tpu.memory_space<vmem>>, %arg5: memref<2x1024xf32, #tpu.memory_space<vmem>>) attributes {dimension_semantics = [#tpu.dimension_semantics<arbitrary>], iteration_bounds = array<i64: 1>, scalar_prefetch = 0 : i64, scratch_operands = 0 : i64, tpu.core_type = #tpu.core_type<tc>, window_params = [{pipeline_mode = #tpu.pipeline_mode<synchronous>, transform_indices = @transform_0, window_bounds = array<i64: 2, 16>}, {pipeline_mode = #tpu.pipeline_mode<synchronous>, transform_indices = @transform_1, window_bounds = array<i64: 16, 1024>}, {pipeline_mode = #tpu.pipeline_mode<synchronous>, transform_indices = @transform_2, window_bounds = array<i64: 1, 1024>}, {pipeline_mode = #tpu.pipeline_mode<synchronous>, transform_indices = @transform_3, window_bounds = array<i64: 1, 1024>}, {pipeline_mode = #tpu.pipeline_mode<synchronous>, transform_indices = @transform_4, window_bounds = array<i64: 2, 1024>}]} {
    %c0 = arith.constant 0 : index
    %c0_0 = arith.constant 0 : index
    %0 = vector.load %arg1[%c0, %c0_0] : memref<2x16xf32, #tpu.memory_space<vmem>>, vector<2x16xf32>
    %c0_1 = arith.constant 0 : index
    %c0_2 = arith.constant 0 : index
    %1 = vector.load %arg2[%c0_1, %c0_2] : memref<16x1024xf32, #tpu.memory_space<vmem>>, vector<16x1024xf32>
    %cst = arith.constant dense<0.000000e+00> : vector<2x1024xf32>
    %2 = tpu.matmul %0, %1, %cst {dimension_numbers = #tpu.dot_dimension_numbers<[1], [0], [0], [1], [0, 0, 1, 1], [], []>} : vector<2x16xf32>, vector<16x1024xf32>, vector<2x1024xf32> -> vector<2x1024xf32>
    %cst_3 = arith.constant dense<0.000000e+00> : vector<1024xf32>
    %3 = vector.multi_reduction <add>, %2, %cst_3 [0] : vector<2x1024xf32> to vector<1024xf32>
    %4 = vector.shape_cast %3 : vector<1024xf32> to vector<1x1024xf32>
    %5 = arith.mulf %2, %2 : vector<2x1024xf32>
    %cst_4 = arith.constant dense<0.000000e+00> : vector<1024xf32>
    %6 = vector.multi_reduction <add>, %5, %cst_4 [0] : vector<2x1024xf32> to vector<1024xf32>
    %7 = vector.shape_cast %6 : vector<1024xf32> to vector<1x1024xf32>
    %cst_5 = arith.constant 2.000000e+00 : f32
    %8 = vector.broadcast %cst_5 : f32 to vector<1x1024xf32>
    %9 = arith.divf %4, %8 : vector<1x1024xf32>
    %cst_6 = arith.constant 2.000000e+00 : f32
    %10 = vector.broadcast %cst_6 : f32 to vector<1x1024xf32>
    %11 = arith.divf %7, %10 : vector<1x1024xf32>
    %12 = arith.mulf %9, %9 : vector<1x1024xf32>
    %13 = arith.subf %11, %12 : vector<1x1024xf32>
    %cst_7 = arith.constant 0.000000e+00 : f32
    %14 = vector.broadcast %cst_7 : f32 to vector<1x1024xf32>
    %15 = arith.maximumf %13, %14 : vector<1x1024xf32>
    %c0_8 = arith.constant 0 : index
    %c0_9 = arith.constant 0 : index
    %16 = vector.load %arg3[%c0_8, %c0_9] : memref<1x1024xf32, #tpu.memory_space<vmem>>, vector<1x1024xf32>
    %cst_10 = arith.constant 9.99999974E-6 : f32
    %17 = vector.broadcast %cst_10 : f32 to vector<1x1024xf32>
    %18 = arith.addf %15, %17 : vector<1x1024xf32>
    %19 = math.rsqrt %18 : vector<1x1024xf32>
    %20 = arith.mulf %16, %19 : vector<1x1024xf32>
    %c0_11 = arith.constant 0 : index
    %c0_12 = arith.constant 0 : index
    %21 = vector.load %arg4[%c0_11, %c0_12] : memref<1x1024xf32, #tpu.memory_space<vmem>>, vector<1x1024xf32>
    %22 = arith.mulf %9, %20 : vector<1x1024xf32>
    %23 = arith.subf %21, %22 : vector<1x1024xf32>
    %24 = vector.broadcast %20 : vector<1x1024xf32> to vector<2x1024xf32>
    %25 = arith.mulf %2, %24 : vector<2x1024xf32>
    %26 = vector.broadcast %23 : vector<1x1024xf32> to vector<2x1024xf32>
    %27 = arith.addf %25, %26 : vector<2x1024xf32>
    %cst_13 = arith.constant 0.000000e+00 : f32
    %28 = vector.broadcast %cst_13 : f32 to vector<2x1024xf32>
    %29 = arith.maximumf %27, %28 : vector<2x1024xf32>
    %c0_14 = arith.constant 0 : index
    %c0_15 = arith.constant 0 : index
    %30 = vector.load %arg5[%c0_14, %c0_15] : memref<2x1024xf32, #tpu.memory_space<vmem>>, vector<2x1024xf32>
    tpu.vector_store %arg5[%c0_14, %c0_15], %29 {strides = array<i32>} : memref<2x1024xf32, #tpu.memory_space<vmem>>, vector<2x1024xf32>,
    return
  }
  func.func @transform_0(%arg0: i32) -> (i32, i32) {
    %c0_i32 = arith.constant 0 : i32
    %c0_i32_0 = arith.constant 0 : i32
    %c0_i32_1 = arith.constant 0 : i32
    return %c0_i32, %c0_i32_0 : i32, i32
  }
  func.func @transform_1(%arg0: i32) -> (i32, i32) {
    %c0_i32 = arith.constant 0 : i32
    %c0_i32_0 = arith.constant 0 : i32
    %c0_i32_1 = arith.constant 0 : i32
    return %c0_i32, %c0_i32_0 : i32, i32
  }
  func.func @transform_2(%arg0: i32) -> (i32, i32) {
    %c0_i32 = arith.constant 0 : i32
    %c0_i32_0 = arith.constant 0 : i32
    %c0_i32_1 = arith.constant 0 : i32
    return %c0_i32, %c0_i32_0 : i32, i32
  }
  func.func @transform_3(%arg0: i32) -> (i32, i32) {
    %c0_i32 = arith.constant 0 : i32
    %c0_i32_0 = arith.constant 0 : i32
    %c0_i32_1 = arith.constant 0 : i32
    return %c0_i32, %c0_i32_0 : i32, i32
  }
  func.func @transform_4(%arg0: i32) -> (i32, i32) {
    %c0_i32 = arith.constant 0 : i32
    %c0_i32_0 = arith.constant 0 : i32
    %c0_i32_1 = arith.constant 0 : i32
    return %c0_i32, %c0_i32_0 : i32, i32
  }
}

</mosaic_0001>

<llo_original>
// kernel: tpu_custom_call.1
$region0: #{tpu_custom_call.1}
  #allocation0 [shape = 'u32[]', space=smem, size = 0x4, offset = 0x4, fixed_abs, tag = 'smem constant byte address 0x4 - core index']
  #allocation1 [shape = 'u32[144,128]{1,0:T(1,128)}', space=vmem, size = 0x12000, scoped, tag = 'internal scratch']
  %s0 = inlined_call_operand.hbm [shape: f32[2,16], index: 0, kind: input, shape index: {}]
  %s1 = inlined_call_operand.hbm [shape: f32[16,1024], index: 1, kind: input, shape index: {}]
  %s2 = inlined_call_operand.hbm [shape: f32[1,1024], index: 2, kind: input, shape index: {}]
  %s3 = inlined_call_operand.vmem [shape: f32[1,1024], index: 3, kind: input, shape index: {}]
  %s4 = inlined_call_operand.hbm [shape: f32[2,1024], index: 4, kind: output, shape index: {}]
  %s5 = sld [smem:[#allocation0]]
  $region38: #{tpu_custom_call.1} parent=0
    _
  %s7 = ssub.s32 1, %s5
  %s8 = scalar_select 0, %s7, %s5
  $region1: #{tpu_custom_call.1} parent=0
    #allocation2 [shape = 'u8[1024]{0}', space=vmem, size = 0x400, scoped, tag = 'input window, operand 0, single buffered']
    #allocation3 [shape = 's32[1]{0}', space=sflag, size = 0x4, scoped, tag = 'scoped memory for tpu_custom_call.1']
    #allocation4 [shape = 's32[1]{0}', space=sflag, size = 0x4, scoped, tag = 'scoped memory for tpu_custom_call.1']
    #allocation5 [shape = 'u8[65536]{0}', space=vmem, size = 0x10000, scoped, tag = 'input window, operand 1, single buffered']
    #allocation6 [shape = 's32[1]{0}', space=sflag, size = 0x4, scoped, tag = 'scoped memory for tpu_custom_call.1']
    #allocation7 [shape = 'u8[4096]{0}', space=vmem, size = 0x1000, scoped, tag = 'input window, operand 2, single buffered']
    #allocation8 [shape = 'u8[8192]{0}', space=vmem, size = 0x2000, scoped, tag = 'output window, operand 0, single buffered']
    %9 = vsyncpa [#allocation3], 0
    %10 = vsyncpa [#allocation6], 0
    %11 = vsyncpa [#allocation4], 0
    // Predicated region
    $region2: #{tpu_custom_call.1} parent=1 // pred_check
      _
    $region3: #{tpu_custom_call.1} parent=1 // pred_check_branch
      %13 = sbr.rel (0) target = $region5
    $region4: #{tpu_custom_call.1} parent=1 // pred_region
      %s15 = ssub.s32 32, 32
      %16 = vsyncadd [#allocation3], %s15
      %s18 = sshll.u32 [#allocation2], 4
      %s19 = int_to_ptr.vmem [resolvable:$true] %s18
      %21 = dma.hbm_to_vmem [thread:$0]  %s0, 32, %s19, [#allocation3]
    $region5: #{tpu_custom_call.1} parent=1 // pred_fallthru
      _
    // Predicated region
    $region6: #{tpu_custom_call.1} parent=1 // pred_check
      _
    $region7: #{tpu_custom_call.1} parent=1 // pred_check_branch
      %23 = sbr.rel (0) target = $region9
    $region8: #{tpu_custom_call.1} parent=1 // pred_region
      %s25 = ssub.s32 2048, 2048
      %26 = vsyncadd [#allocation6], %s25
      %s27 = sshll.u32 [#allocation5], 4
      %s28 = int_to_ptr.vmem [resolvable:$true] %s27
      %33 = dma.hbm_to_vmem [thread:$0]  %s1, 2048, %s28, [#allocation6], 1024, 1024, 64
    $region9: #{tpu_custom_call.1} parent=1 // pred_fallthru
      _
    // Predicated region
    $region10: #{tpu_custom_call.1} parent=1 // pred_check
      _
    $region11: #{tpu_custom_call.1} parent=1 // pred_check_branch
      %35 = sbr.rel (0) target = $region13
    $region12: #{tpu_custom_call.1} parent=1 // pred_region
      %s37 = ssub.s32 128, 128
      %38 = vsyncadd [#allocation6], %s37
      %s40 = sshll.u32 [#allocation7], 4
      %s41 = int_to_ptr.vmem [resolvable:$true] %s40
      %43 = dma.hbm_to_vmem [thread:$0]  %s2, 128, %s41, [#allocation6]
    $region13: #{tpu_custom_call.1} parent=1 // pred_fallthru
      _
    // Predicated region
    $region14: #{tpu_custom_call.1} parent=1 // pred_check
      _
    $region15: #{tpu_custom_call.1} parent=1 // pred_check_branch
      %45 = sbr.rel (0) target = $region17
    $region16: #{tpu_custom_call.1} parent=1 // pred_region
      _
    $region17: #{tpu_custom_call.1} parent=1 // pred_fallthru
      _
    // Predicated region
    $region18: #{tpu_custom_call.1} parent=1 // pred_check
      _
    $region19: #{tpu_custom_call.1} parent=1 // pred_check_branch
      %47 = sbr.rel (0) target = $region21
    $region20: #{tpu_custom_call.1} parent=1 // pred_region
      %48 = dma.done [#allocation3], 32
    $region21: #{tpu_custom_call.1} parent=1 // pred_fallthru
      _
    // Predicated region
    $region22: #{tpu_custom_call.1} parent=1 // pred_check
      _
    $region23: #{tpu_custom_call.1} parent=1 // pred_check_branch
      %50 = sbr.rel (0) target = $region25
    $region24: #{tpu_custom_call.1} parent=1 // pred_region
      %51 = dma.done [#allocation6], 2048
    $region25: #{tpu_custom_call.1} parent=1 // pred_fallthru
      _
    // Predicated region
    $region26: #{tpu_custom_call.1} parent=1 // pred_check
      _
    $region27: #{tpu_custom_call.1} parent=1 // pred_check_branch
      %53 = sbr.rel (0) target = $region29
    $region28: #{tpu_custom_call.1} parent=1 // pred_region
      %54 = dma.done [#allocation6], 128
    $region29: #{tpu_custom_call.1} parent=1 // pred_fallthru
      _
    %v55 = vld [vmem:[#allocation2] sm:$0x3]
    %v56 = vld [vmem:[#allocation5] sm:$0xff]
    %v57 = vld [vmem:[#allocation5 + $0x8] sm:$0xff]
    %v58 = vld [vmem:[#allocation5 + $0x10] sm:$0xff]
    %v59 = vld [vmem:[#allocation5 + $0x18] sm:$0xff]
    %v60 = vld [vmem:[#allocation5 + $0x20] sm:$0xff]
    %v61 = vld [vmem:[#allocation5 + $0x28] sm:$0xff]
    %v62 = vld [vmem:[#allocation5 + $0x30] sm:$0xff]
    %v63 = vld [vmem:[#allocation5 + $0x38] sm:$0xff]
    %v64 = vld [vmem:[#allocation5 + $0x40] sm:$0xff]
    %v65 = vld [vmem:[#allocation5 + $0x48] sm:$0xff]
    %v66 = vld [vmem:[#allocation5 + $0x50] sm:$0xff]
    %v67 = vld [vmem:[#allocation5 + $0x58] sm:$0xff]
    %v68 = vld [vmem:[#allocation5 + $0x60] sm:$0xff]
    %v69 = vld [vmem:[#allocation5 + $0x68] sm:$0xff]
    %v70 = vld [vmem:[#allocation5 + $0x70] sm:$0xff]
    %v71 = vld [vmem:[#allocation5 + $0x78] sm:$0xff]
    %vm72 = vcmask 130048
    %v74 = vsel %vm72, %v55, 0
    %76 = vmatprep.subr.mxu0 %v57
    %77 = vmatpush1.msra.mxu0 %v56
    %78 = vmatprep.subr.mxu0 %v65
    %79 = vmatpush1.msra.mxu0 %v64
    %80 = vmatprep.subr.mxu0 0.0
    %81 = vmatpush1.msra.mxu0 0.0
    %82 = vmatprep.subr.mxu0 0.0
    %83 = vmatpush1.msra.mxu0 0.0
    %84 = vmatprep.subr.mxu0 0.0
    %85 = vmatpush1.msra.mxu0 0.0
    %86 = vmatprep.subr.mxu0 0.0
    %87 = vmatpush1.msra.mxu0 0.0
    %88 = vmatprep.subr.mxu0 0.0
    %89 = vmatpush1.msra.mxu0 0.0
    %90 = vmatprep.subr.mxu0 0.0
    %91 = vmatpush1.msra.mxu0 0.0
    %92 = vmatprep.subr.mxu0 0.0
    %93 = vmatpush1.msra.mxu0 0.0
    %94 = vmatprep.subr.mxu0 0.0
    %95 = vmatpush1.msra.mxu0 0.0
    %96 = vmatprep.subr.mxu0 0.0
    %97 = vmatpush1.msra.mxu0 0.0
    %98 = vmatprep.subr.mxu0 0.0
    %99 = vmatpush1.msra.mxu0 0.0
    %100 = vmatprep.subr.mxu0 0.0
    %101 = vmatpush1.msra.mxu0 0.0
    %102 = vmatprep.subr.mxu0 0.0
    %103 = vmatpush1.msra.mxu0 0.0
    %104 = vmatprep.subr.mxu0 0.0
    %105 = vmatpush1.msra.mxu0 0.0
    %106 = vmatprep.subr.mxu0 0.0
    %107 = vmatpush1.msra.mxu0 0.0
    %108 = vmatprep.subr.mxu0 0.0
    %109 = vmatpush1.msra.mxu0 0.0
    %110 = vmatprep.subr.mxu0 0.0
    %111 = vmatpush1.msra.mxu0 0.0
    %112 = vmatprep.subr.mxu0 0.0
    %113 = vmatpush1.msra.mxu0 0.0
    %114 = vmatprep.subr.mxu0 0.0
    %115 = vmatpush1.msra.mxu0 0.0
    %116 = vmatprep.subr.mxu0 0.0
    %117 = vmatpush1.msra.mxu0 0.0
    %118 = vmatprep.subr.mxu0 0.0
    %119 = vmatpush1.msra.mxu0 0.0
    %120 = vmatprep.subr.mxu0 0.0
    %121 = vmatpush1.msra.mxu0 0.0
    %122 = vmatprep.subr.mxu0 0.0
    %123 = vmatpush1.msra.mxu0 0.0
    %124 = vmatprep.subr.mxu0 0.0
    %125 = vmatpush1.msra.mxu0 0.0
    %126 = vmatprep.subr.mxu0 0.0
    %127 = vmatpush1.msra.mxu0 0.0
    %128 = vmatprep.subr.mxu0 0.0
    %129 = vmatpush1.msra.mxu0 0.0
    %130 = vmatprep.subr.mxu0 0.0
    %131 = vmatpush1.msra.mxu0 0.0
    %132 = vmatprep.subr.mxu0 0.0
    %133 = vmatpush1.msra.mxu0 0.0
    %134 = vmatprep.subr.mxu0 0.0
    %135 = vmatpush1.msra.mxu0 0.0
    %136 = vmatprep.subr.mxu0 0.0
    %137 = vmatpush1.msra.mxu0 0.0
    %138 = vmatprep.subr.mxu0 0.0
    %139 = vmatpush1.msra.mxu0 0.0
    %140 = vmatprep.mubr.f32.mxu0 0.0
    %141 = vmatmul.mubr.f32.gmra.mrb[0].mxu0 %v74
    %v142 = vpop.f32.mrb[0].mxu0
    %v143 = vadd.f32 0.0, %v142
    %v144 = vpop.f32.mrb[0].mxu0
    %v145 = vadd.f32 0.0, %v144
    %146 = vdwg.mxu0
    %147 = vmatprep.subr.mxu0 %v59
    %148 = vmatpush1.msra.mxu0 %v58
    %149 = vmatprep.subr.mxu0 %v67
    %150 = vmatpush1.msra.mxu0 %v66
    %151 = vmatprep.subr.mxu0 0.0
    %152 = vmatpush1.msra.mxu0 0.0
    %153 = vmatprep.subr.mxu0 0.0
    %154 = vmatpush1.msra.mxu0 0.0
    %155 = vmatprep.subr.mxu0 0.0
    %156 = vmatpush1.msra.mxu0 0.0
    %157 = vmatprep.subr.mxu0 0.0
    %158 = vmatpush1.msra.mxu0 0.0
    %159 = vmatprep.subr.mxu0 0.0
    %160 = vmatpush1.msra.mxu0 0.0
    %161 = vmatprep.subr.mxu0 0.0
    %162 = vmatpush1.msra.mxu0 0.0
    %163 = vmatprep.subr.mxu0 0.0
    %164 = vmatpush1.msra.mxu0 0.0
    %165 = vmatprep.subr.mxu0 0.0
    %166 = vmatpush1.msra.mxu0 0.0
    %167 = vmatprep.subr.mxu0 0.0
    %168 = vmatpush1.msra.mxu0 0.0
    %169 = vmatprep.subr.mxu0 0.0
    %170 = vmatpush1.msra.mxu0 0.0
    %171 = vmatprep.subr.mxu0 0.0
    %172 = vmatpush1.msra.mxu0 0.0
    %173 = vmatprep.subr.mxu0 0.0
    %174 = vmatpush1.msra.mxu0 0.0
    %175 = vmatprep.subr.mxu0 0.0
    %176 = vmatpush1.msra.mxu0 0.0
    %177 = vmatprep.subr.mxu0 0.0
    %178 = vmatpush1.msra.mxu0 0.0
    %179 = vmatprep.subr.mxu0 0.0
    %180 = vmatpush1.msra.mxu0 0.0
    %181 = vmatprep.subr.mxu0 0.0
    %182 = vmatpush1.msra.mxu0 0.0
    %183 = vmatprep.subr.mxu0 0.0
    %184 = vmatpush1.msra.mxu0 0.0
    %185 = vmatprep.subr.mxu0 0.0
    %186 = vmatpush1.msra.mxu0 0.0
    %187 = vmatprep.subr.mxu0 0.0
    %188 = vmatpush1.msra.mxu0 0.0
    %189 = vmatprep.subr.mxu0 0.0
    %190 = vmatpush1.msra.mxu0 0.0
    %191 = vmatprep.subr.mxu0 0.0
    %192 = vmatpush1.msra.mxu0 0.0
    %193 = vmatprep.subr.mxu0 0.0
    %194 = vmatpush1.msra.mxu0 0.0
    %195 = vmatprep.subr.mxu0 0.0
    %196 = vmatpush1.msra.mxu0 0.0
    %197 = vmatprep.subr.mxu0 0.0
    %198 = vmatpush1.msra.mxu0 0.0
    %199 = vmatprep.subr.mxu0 0.0
    %200 = vmatpush1.msra.mxu0 0.0
    %201 = vmatprep.subr.mxu0 0.0
    %202 = vmatpush1.msra.mxu0 0.0
    %203 = vmatprep.subr.mxu0 0.0
    %204 = vmatpush1.msra.mxu0 0.0
    %205 = vmatprep.subr.mxu0 0.0
    %206 = vmatpush1.msra.mxu0 0.0
    %207 = vmatprep.subr.mxu0 0.0
    %208 = vmatpush1.msra.mxu0 0.0
    %209 = vmatprep.subr.mxu0 0.0
    %210 = vmatpush1.msra.mxu0 0.0
    %211 = vmatprep.mubr.f32.mxu0 0.0
    %212 = vmatmul.mubr.f32.gmra.mrb[0].mxu0 %v74
    %v213 = vpop.f32.mrb[0].mxu0
    %v214 = vadd.f32 0.0, %v213
    %v215 = vpop.f32.mrb[0].mxu0
    %v216 = vadd.f32 0.0, %v215
    %217 = vdwg.mxu0
    %218 = vmatprep.subr.mxu0 %v61
    %219 = vmatpush1.msra.mxu0 %v60
    %220 = vmatprep.subr.mxu0 %v69
    %221 = vmatpush1.msra.mxu0 %v68
    %222 = vmatprep.subr.mxu0 0.0
    %223 = vmatpush1.msra.mxu0 0.0
    %224 = vmatprep.subr.mxu0 0.0
    %225 = vmatpush1.msra.mxu0 0.0
    %226 = vmatprep.subr.mxu0 0.0
    %227 = vmatpush1.msra.mxu0 0.0
    %228 = vmatprep.subr.mxu0 0.0
    %229 = vmatpush1.msra.mxu0 0.0
    %230 = vmatprep.subr.mxu0 0.0
    %231 = vmatpush1.msra.mxu0 0.0
    %232 = vmatprep.subr.mxu0 0.0
    %233 = vmatpush1.msra.mxu0 0.0
    %234 = vmatprep.subr.mxu0 0.0
    %235 = vmatpush1.msra.mxu0 0.0
    %236 = vmatprep.subr.mxu0 0.0
    %237 = vmatpush1.msra.mxu0 0.0
    %238 = vmatprep.subr.mxu0 0.0
    %239 = vmatpush1.msra.mxu0 0.0
    %240 = vmatprep.subr.mxu0 0.0
    %241 = vmatpush1.msra.mxu0 0.0
    %242 = vmatprep.subr.mxu0 0.0
    %243 = vmatpush1.msra.mxu0 0.0
    %244 = vmatprep.subr.mxu0 0.0
    %245 = vmatpush1.msra.mxu0 0.0
    %246 = vmatprep.subr.mxu0 0.0
    %247 = vmatpush1.msra.mxu0 0.0
    %248 = vmatprep.subr.mxu0 0.0
    %249 = vmatpush1.msra.mxu0 0.0
    %250 = vmatprep.subr.mxu0 0.0
    %251 = vmatpush1.msra.mxu0 0.0
    %252 = vmatprep.subr.mxu0 0.0
    %253 = vmatpush1.msra.mxu0 0.0
    %254 = vmatprep.subr.mxu0 0.0
    %255 = vmatpush1.msra.mxu0 0.0
    %256 = vmatprep.subr.mxu0 0.0
    %257 = vmatpush1.msra.mxu0 0.0
    %258 = vmatprep.subr.mxu0 0.0
    %259 = vmatpush1.msra.mxu0 0.0
    %260 = vmatprep.subr.mxu0 0.0
    %261 = vmatpush1.msra.mxu0 0.0
    %262 = vmatprep.subr.mxu0 0.0
    %263 = vmatpush1.msra.mxu0 0.0
    %264 = vmatprep.subr.mxu0 0.0
    %265 = vmatpush1.msra.mxu0 0.0
    %266 = vmatprep.subr.mxu0 0.0
    %267 = vmatpush1.msra.mxu0 0.0
    %268 = vmatprep.subr.mxu0 0.0
    %269 = vmatpush1.msra.mxu0 0.0
    %270 = vmatprep.subr.mxu0 0.0
    %271 = vmatpush1.msra.mxu0 0.0
    %272 = vmatprep.subr.mxu0 0.0
    %273 = vmatpush1.msra.mxu0 0.0
    %274 = vmatprep.subr.mxu0 0.0
    %275 = vmatpush1.msra.mxu0 0.0
    %276 = vmatprep.subr.mxu0 0.0
    %277 = vmatpush1.msra.mxu0 0.0
    %278 = vmatprep.subr.mxu0 0.0
    %279 = vmatpush1.msra.mxu0 0.0
    %280 = vmatprep.subr.mxu0 0.0
    %281 = vmatpush1.msra.mxu0 0.0
    %282 = vmatprep.mubr.f32.mxu0 0.0
    %283 = vmatmul.mubr.f32.gmra.mrb[0].mxu0 %v74
    %v284 = vpop.f32.mrb[0].mxu0
    %v285 = vadd.f32 0.0, %v284
    %v286 = vpop.f32.mrb[0].mxu0
    %v287 = vadd.f32 0.0, %v286
    %288 = vdwg.mxu0
    %289 = vmatprep.subr.mxu0 %v63
    %290 = vmatpush1.msra.mxu0 %v62
    %291 = vmatprep.subr.mxu0 %v71
    %292 = vmatpush1.msra.mxu0 %v70
    %293 = vmatprep.subr.mxu0 0.0
    %294 = vmatpush1.msra.mxu0 0.0
    %295 = vmatprep.subr.mxu0 0.0
    %296 = vmatpush1.msra.mxu0 0.0
    %297 = vmatprep.subr.mxu0 0.0
    %298 = vmatpush1.msra.mxu0 0.0
    %299 = vmatprep.subr.mxu0 0.0
    %300 = vmatpush1.msra.mxu0 0.0
    %301 = vmatprep.subr.mxu0 0.0
    %302 = vmatpush1.msra.mxu0 0.0
    %303 = vmatprep.subr.mxu0 0.0
    %304 = vmatpush1.msra.mxu0 0.0
    %305 = vmatprep.subr.mxu0 0.0
    %306 = vmatpush1.msra.mxu0 0.0
    %307 = vmatprep.subr.mxu0 0.0
    %308 = vmatpush1.msra.mxu0 0.0
    %309 = vmatprep.subr.mxu0 0.0
    %310 = vmatpush1.msra.mxu0 0.0
    %311 = vmatprep.subr.mxu0 0.0
    %312 = vmatpush1.msra.mxu0 0.0
    %313 = vmatprep.subr.mxu0 0.0
    %314 = vmatpush1.msra.mxu0 0.0
    %315 = vmatprep.subr.mxu0 0.0
    %316 = vmatpush1.msra.mxu0 0.0
    %317 = vmatprep.subr.mxu0 0.0
    %318 = vmatpush1.msra.mxu0 0.0
    %319 = vmatprep.subr.mxu0 0.0
    %320 = vmatpush1.msra.mxu0 0.0
    %321 = vmatprep.subr.mxu0 0.0
    %322 = vmatpush1.msra.mxu0 0.0
    %323 = vmatprep.subr.mxu0 0.0
    %324 = vmatpush1.msra.mxu0 0.0
    %325 = vmatprep.subr.mxu0 0.0
    %326 = vmatpush1.msra.mxu0 0.0
    %327 = vmatprep.subr.mxu0 0.0
    %328 = vmatpush1.msra.mxu0 0.0
    %329 = vmatprep.subr.mxu0 0.0
    %330 = vmatpush1.msra.mxu0 0.0
    %331 = vmatprep.subr.mxu0 0.0
    %332 = vmatpush1.msra.mxu0 0.0
    %333 = vmatprep.subr.mxu0 0.0
    %334 = vmatpush1.msra.mxu0 0.0
    %335 = vmatprep.subr.mxu0 0.0
    %336 = vmatpush1.msra.mxu0 0.0
    %337 = vmatprep.subr.mxu0 0.0
    %338 = vmatpush1.msra.mxu0 0.0
    %339 = vmatprep.subr.mxu0 0.0
    %340 = vmatpush1.msra.mxu0 0.0
    %341 = vmatprep.subr.mxu0 0.0
    %342 = vmatpush1.msra.mxu0 0.0
    %343 = vmatprep.subr.mxu0 0.0
    %344 = vmatpush1.msra.mxu0 0.0
    %345 = vmatprep.subr.mxu0 0.0
    %346 = vmatpush1.msra.mxu0 0.0
    %347 = vmatprep.subr.mxu0 0.0
    %348 = vmatpush1.msra.mxu0 0.0
    %349 = vmatprep.subr.mxu0 0.0
    %350 = vmatpush1.msra.mxu0 0.0
    %351 = vmatprep.subr.mxu0 0.0
    %352 = vmatpush1.msra.mxu0 0.0
    %353 = vmatprep.mubr.f32.mxu0 0.0
    %354 = vmatmul.mubr.f32.gmra.mrb[0].mxu0 %v74
    %v355 = vpop.f32.mrb[0].mxu0
    %v356 = vadd.f32 0.0, %v355
    %v357 = vpop.f32.mrb[0].mxu0
    %v358 = vadd.f32 0.0, %v357
    %359 = vdwg.mxu0
    %vm360 = vcmask 1041408
    %v361 = vsel %vm360, %v143, 0.0
    %v362 = vrot.slane %v361, 4
    %v363 = vadd.f32 %v361, %v362
    %v364 = vrot.slane %v363, 2
    %v365 = vadd.f32 %v363, %v364
    %v366 = vrot.slane %v365, 1
    %v367 = vadd.f32 %v365, %v366
    %v368 = vsel %vm360, %v145, 0.0
    %v369 = vrot.slane %v368, 4
    %v370 = vadd.f32 %v368, %v369
    %v371 = vrot.slane %v370, 2
    %v372 = vadd.f32 %v370, %v371
    %v373 = vrot.slane %v372, 1
    %v374 = vadd.f32 %v372, %v373
    %v375 = vsel %vm360, %v214, 0.0
    %v376 = vrot.slane %v375, 4
    %v377 = vadd.f32 %v375, %v376
    %v378 = vrot.slane %v377, 2
    %v379 = vadd.f32 %v377, %v378
    %v380 = vrot.slane %v379, 1
    %v381 = vadd.f32 %v379, %v380
    %v382 = vsel %vm360, %v216, 0.0
    %v383 = vrot.slane %v382, 4
    %v384 = vadd.f32 %v382, %v383
    %v385 = vrot.slane %v384, 2
    %v386 = vadd.f32 %v384, %v385
    %v387 = vrot.slane %v386, 1
    %v388 = vadd.f32 %v386, %v387
    %v389 = vsel %vm360, %v285, 0.0
    %v390 = vrot.slane %v389, 4
    %v391 = vadd.f32 %v389, %v390
    %v392 = vrot.slane %v391, 2
    %v393 = vadd.f32 %v391, %v392
    %v394 = vrot.slane %v393, 1
    %v395 = vadd.f32 %v393, %v394
    %v396 = vsel %vm360, %v287, 0.0
    %v397 = vrot.slane %v396, 4
    %v398 = vadd.f32 %v396, %v397
    %v399 = vrot.slane %v398, 2
    %v400 = vadd.f32 %v398, %v399
    %v401 = vrot.slane %v400, 1
    %v402 = vadd.f32 %v400, %v401
    %v403 = vsel %vm360, %v356, 0.0
    %v404 = vrot.slane %v403, 4
    %v405 = vadd.f32 %v403, %v404
    %v406 = vrot.slane %v405, 2
    %v407 = vadd.f32 %v405, %v406
    %v408 = vrot.slane %v407, 1
    %v409 = vadd.f32 %v407, %v408
    %v410 = vsel %vm360, %v358, 0.0
    %v411 = vrot.slane %v410, 4
    %v412 = vadd.f32 %v410, %v411
    %v413 = vrot.slane %v412, 2
    %v414 = vadd.f32 %v412, %v413
    %v415 = vrot.slane %v414, 1
    %v416 = vadd.f32 %v414, %v415
    %v417 = vmul.f32 %v143, %v143
    %v418 = vmul.f32 %v145, %v145
    %v419 = vmul.f32 %v214, %v214
    %v420 = vmul.f32 %v216, %v216
    %v421 = vmul.f32 %v285, %v285
    %v422 = vmul.f32 %v287, %v287
    %v423 = vmul.f32 %v356, %v356
    %v424 = vmul.f32 %v358, %v358
    %v425 = vsel %vm360, %v417, 0.0
    %v426 = vrot.slane %v425, 4
    %v427 = vadd.f32 %v425, %v426
    %v428 = vrot.slane %v427, 2
    %v429 = vadd.f32 %v427, %v428
    %v430 = vrot.slane %v429, 1
    %v431 = vadd.f32 %v429, %v430
    %v432 = vsel %vm360, %v418, 0.0
    %v433 = vrot.slane %v432, 4
    %v434 = vadd.f32 %v432, %v433
    %v435 = vrot.slane %v434, 2
    %v436 = vadd.f32 %v434, %v435
    %v437 = vrot.slane %v436, 1
    %v438 = vadd.f32 %v436, %v437
    %v439 = vsel %vm360, %v419, 0.0
    %v440 = vrot.slane %v439, 4
    %v441 = vadd.f32 %v439, %v440
    %v442 = vrot.slane %v441, 2
    %v443 = vadd.f32 %v441, %v442
    %v444 = vrot.slane %v443, 1
    %v445 = vadd.f32 %v443, %v444
    %v446 = vsel %vm360, %v420, 0.0
    %v447 = vrot.slane %v446, 4
    %v448 = vadd.f32 %v446, %v447
    %v449 = vrot.slane %v448, 2
    %v450 = vadd.f32 %v448, %v449
    %v451 = vrot.slane %v450, 1
    %v452 = vadd.f32 %v450, %v451
    %v453 = vsel %vm360, %v421, 0.0
    %v454 = vrot.slane %v453, 4
    %v455 = vadd.f32 %v453, %v454
    %v456 = vrot.slane %v455, 2
    %v457 = vadd.f32 %v455, %v456
    %v458 = vrot.slane %v457, 1
    %v459 = vadd.f32 %v457, %v458
    %v460 = vsel %vm360, %v422, 0.0
    %v461 = vrot.slane %v460, 4
    %v462 = vadd.f32 %v460, %v461
    %v463 = vrot.slane %v462, 2
    %v464 = vadd.f32 %v462, %v463
    %v465 = vrot.slane %v464, 1
    %v466 = vadd.f32 %v464, %v465
    %v467 = vsel %vm360, %v423, 0.0
    %v468 = vrot.slane %v467, 4
    %v469 = vadd.f32 %v467, %v468
    %v470 = vrot.slane %v469, 2
    %v471 = vadd.f32 %v469, %v470
    %v472 = vrot.slane %v471, 1
    %v473 = vadd.f32 %v471, %v472
    %v474 = vsel %vm360, %v424, 0.0
    %v475 = vrot.slane %v474, 4
    %v476 = vadd.f32 %v474, %v475
    %v477 = vrot.slane %v476, 2
    %v478 = vadd.f32 %v476, %v477
    %v479 = vrot.slane %v478, 1
    %v480 = vadd.f32 %v478, %v479
    %v481 = vrcp.pop 2.0
    %v482 = vmul.f32 %v367, %v481
    %v483 = vmul.f32 %v374, %v481
    %v484 = vmul.f32 %v381, %v481
    %v485 = vmul.f32 %v388, %v481
    %v486 = vmul.f32 %v395, %v481
    %v487 = vmul.f32 %v402, %v481
    %v488 = vmul.f32 %v409, %v481
    %v489 = vmul.f32 %v416, %v481
    %v490 = vmul.f32 %v431, %v481
    %v491 = vmul.f32 %v438, %v481
    %v492 = vmul.f32 %v445, %v481
    %v493 = vmul.f32 %v452, %v481
    %v494 = vmul.f32 %v459, %v481
    %v495 = vmul.f32 %v466, %v481
    %v496 = vmul.f32 %v473, %v481
    %v497 = vmul.f32 %v480, %v481
    %v498 = vmul.f32 %v482, %v482
    %v499 = vmul.f32 %v483, %v483
    %v500 = vmul.f32 %v484, %v484
    %v501 = vmul.f32 %v485, %v485
    %v502 = vmul.f32 %v486, %v486
    %v503 = vmul.f32 %v487, %v487
    %v504 = vmul.f32 %v488, %v488
    %v505 = vmul.f32 %v489, %v489
    %v506 = vsub.f32 %v490, %v498
    %v507 = vsub.f32 %v491, %v499
    %v508 = vsub.f32 %v492, %v500
    %v509 = vsub.f32 %v493, %v501
    %v510 = vsub.f32 %v494, %v502
    %v511 = vsub.f32 %v495, %v503
    %v512 = vsub.f32 %v496, %v504
    %v513 = vsub.f32 %v497, %v505
    %v514 = vmax.f32 %v506, 0.0
    %v515 = vmax.f32 %v507, 0.0
    %v516 = vmax.f32 %v508, 0.0
    %v517 = vmax.f32 %v509, 0.0
    %v518 = vmax.f32 %v510, 0.0
    %v519 = vmax.f32 %v511, 0.0
    %v520 = vmax.f32 %v512, 0.0
    %v521 = vmax.f32 %v513, 0.0
    %v522 = vld [vmem:[#allocation7] sm:$0xff]
    %v523 = vadd.f32 %v514, 1e-05
    %v524 = vadd.f32 %v515, 1e-05
    %v525 = vadd.f32 %v516, 1e-05
    %v526 = vadd.f32 %v517, 1e-05
    %v527 = vadd.f32 %v518, 1e-05
    %v528 = vadd.f32 %v519, 1e-05
    %v529 = vadd.f32 %v520, 1e-05
    %v530 = vadd.f32 %v521, 1e-05
    %v531 = vrsqrt.pop %v523
    %v532 = vrsqrt.pop %v524
    %v533 = vrsqrt.pop %v525
    %v534 = vrsqrt.pop %v526
    %v535 = vrsqrt.pop %v527
    %v536 = vrsqrt.pop %v528
    %v537 = vrsqrt.pop %v529
    %v538 = vrsqrt.pop %v530
    %v547 = vcombine.low %v531, %v532
    %v548 = vcombine.low %v533, %v534
    %v549 = vcombine.low %v535, %v536
    %v550 = vcombine.low %v537, %v538
    %v552 = vunpack.c.l.s4 1966171168
    %v553 = vunpack.c.0.s8 %v552
    %v554 = vlaneseq
    %v555 = vshrl.u32 %v554, 7
    %v556 = vsub.s32 %v553, %v555
    %v557 = vrot.slane %v547, %v556
    %v559 = vunpack.c.l.s4 1966171168
    %v560 = vunpack.c.0.s8 %v559
    %v561 = vlaneseq
    %v562 = vshrl.u32 %v561, 7
    %v563 = vsub.s32 %v560, %v562
    %v564 = vrot.slane %v548, %v563
    %v566 = vunpack.c.l.s4 1966171168
    %v567 = vunpack.c.0.s8 %v566
    %v568 = vlaneseq
    %v569 = vshrl.u32 %v568, 7
    %v570 = vsub.s32 %v567, %v569
    %v571 = vrot.slane %v549, %v570
    %v573 = vunpack.c.l.s4 1966171168
    %v574 = vunpack.c.0.s8 %v573
    %v575 = vlaneseq
    %v576 = vshrl.u32 %v575, 7
    %v577 = vsub.s32 %v574, %v576
    %v578 = vrot.slane %v550, %v577
    %v579 = vcombine.low %v557, %v564
    %v580 = vcombine.low %v571, %v578
    %v582 = vunpack.c.l.s4 1966171168
    %v583 = vunpack.c.0.s8 %v582
    %v584 = vlaneseq
    %v585 = vshrl.u32 %v584, 7
    %v586 = vsub.s32 %v583, %v585
    %v587 = vrot.slane %v579, %v586
    %v589 = vunpack.c.l.s4 1966171168
    %v590 = vunpack.c.0.s8 %v589
    %v591 = vlaneseq
    %v592 = vshrl.u32 %v591, 7
    %v593 = vsub.s32 %v590, %v592
    %v594 = vrot.slane %v580, %v593
    %v595 = vcombine.low %v587, %v594
    %v597 = vmul.f32 %v522, %v595
    %v598 = vld [vmem:[%s3] sm:$0xff]
    %v600 = vlaneseq
    %v601 = vshrl.u32 %v600, 7
    %v602 = vsub.s32 0, %v601
    %v603 = vrot.slane %v597, %v602
    %v604 = vlaneseq
    %v605 = vshrl.u32 %v604, 7
    %v606 = vsub.s32 1, %v605
    %v607 = vrot.slane %v597, %v606
    %v608 = vlaneseq
    %v609 = vshrl.u32 %v608, 7
    %v610 = vsub.s32 2, %v609
    %v611 = vrot.slane %v597, %v610
    %v612 = vlaneseq
    %v613 = vshrl.u32 %v612, 7
    %v614 = vsub.s32 3, %v613
    %v615 = vrot.slane %v597, %v614
    %v616 = vlaneseq
    %v617 = vshrl.u32 %v616, 7
    %v618 = vsub.s32 4, %v617
    %v619 = vrot.slane %v597, %v618
    %v620 = vlaneseq
    %v621 = vshrl.u32 %v620, 7
    %v622 = vsub.s32 5, %v621
    %v623 = vrot.slane %v597, %v622
    %v624 = vlaneseq
    %v625 = vshrl.u32 %v624, 7
    %v626 = vsub.s32 6, %v625
    %v627 = vrot.slane %v597, %v626
    %v628 = vlaneseq
    %v629 = vshrl.u32 %v628, 7
    %v630 = vsub.s32 7, %v629
    %v631 = vrot.slane %v597, %v630
    %v640 = vmul.f32 %v482, %v603
    %v641 = vmul.f32 %v483, %v607
    %v642 = vmul.f32 %v484, %v611
    %v643 = vmul.f32 %v485, %v615
    %v644 = vmul.f32 %v486, %v619
    %v645 = vmul.f32 %v487, %v623
    %v646 = vmul.f32 %v488, %v627
    %v647 = vmul.f32 %v489, %v631
    %v656 = vcombine.low %v640, %v641
    %v657 = vcombine.low %v642, %v643
    %v658 = vcombine.low %v644, %v645
    %v659 = vcombine.low %v646, %v647
    %v661 = vunpack.c.l.s4 1966171168
    %v662 = vunpack.c.0.s8 %v661
    %v663 = vlaneseq
    %v664 = vshrl.u32 %v663, 7
    %v665 = vsub.s32 %v662, %v664
    %v666 = vrot.slane %v656, %v665
    %v668 = vunpack.c.l.s4 1966171168
    %v669 = vunpack.c.0.s8 %v668
    %v670 = vlaneseq
    %v671 = vshrl.u32 %v670, 7
    %v672 = vsub.s32 %v669, %v671
    %v673 = vrot.slane %v657, %v672
    %v675 = vunpack.c.l.s4 1966171168
    %v676 = vunpack.c.0.s8 %v675
    %v677 = vlaneseq
    %v678 = vshrl.u32 %v677, 7
    %v679 = vsub.s32 %v676, %v678
    %v680 = vrot.slane %v658, %v679
    %v682 = vunpack.c.l.s4 1966171168
    %v683 = vunpack.c.0.s8 %v682
    %v684 = vlaneseq
    %v685 = vshrl.u32 %v684, 7
    %v686 = vsub.s32 %v683, %v685
    %v687 = vrot.slane %v659, %v686
    %v688 = vcombine.low %v666, %v673
    %v689 = vcombine.low %v680, %v687
    %v691 = vunpack.c.l.s4 1966171168
    %v692 = vunpack.c.0.s8 %v691
    %v693 = vlaneseq
    %v694 = vshrl.u32 %v693, 7
    %v695 = vsub.s32 %v692, %v694
    %v696 = vrot.slane %v688, %v695
    %v698 = vunpack.c.l.s4 1966171168
    %v699 = vunpack.c.0.s8 %v698
    %v700 = vlaneseq
    %v701 = vshrl.u32 %v700, 7
    %v702 = vsub.s32 %v699, %v701
    %v703 = vrot.slane %v689, %v702
    %v704 = vcombine.low %v696, %v703
    %v706 = vsub.f32 %v598, %v704
    %v707 = vmul.f32 %v143, %v603
    %v708 = vmul.f32 %v145, %v607
    %v709 = vmul.f32 %v214, %v611
    %v710 = vmul.f32 %v216, %v615
    %v711 = vmul.f32 %v285, %v619
    %v712 = vmul.f32 %v287, %v623
    %v713 = vmul.f32 %v356, %v627
    %v714 = vmul.f32 %v358, %v631
    %v716 = vlaneseq
    %v717 = vshrl.u32 %v716, 7
    %v718 = vsub.s32 0, %v717
    %v719 = vrot.slane %v706, %v718
    %v720 = vlaneseq
    %v721 = vshrl.u32 %v720, 7
    %v722 = vsub.s32 1, %v721
    %v723 = vrot.slane %v706, %v722
    %v724 = vlaneseq
    %v725 = vshrl.u32 %v724, 7
    %v726 = vsub.s32 2, %v725
    %v727 = vrot.slane %v706, %v726
    %v728 = vlaneseq
    %v729 = vshrl.u32 %v728, 7
    %v730 = vsub.s32 3, %v729
    %v731 = vrot.slane %v706, %v730
    %v732 = vlaneseq
    %v733 = vshrl.u32 %v732, 7
    %v734 = vsub.s32 4, %v733
    %v735 = vrot.slane %v706, %v734
    %v736 = vlaneseq
    %v737 = vshrl.u32 %v736, 7
    %v738 = vsub.s32 5, %v737
    %v739 = vrot.slane %v706, %v738
    %v740 = vlaneseq
    %v741 = vshrl.u32 %v740, 7
    %v742 = vsub.s32 6, %v741
    %v743 = vrot.slane %v706, %v742
    %v744 = vlaneseq
    %v745 = vshrl.u32 %v744, 7
    %v746 = vsub.s32 7, %v745
    %v747 = vrot.slane %v706, %v746
    %v756 = vadd.f32 %v707, %v719
    %v757 = vadd.f32 %v708, %v723
    %v758 = vadd.f32 %v709, %v727
    %v759 = vadd.f32 %v710, %v731
    %v760 = vadd.f32 %v711, %v735
    %v761 = vadd.f32 %v712, %v739
    %v762 = vadd.f32 %v713, %v743
    %v763 = vadd.f32 %v714, %v747
    %v764 = vmax.f32 %v756, 0.0
    %v765 = vmax.f32 %v757, 0.0
    %v766 = vmax.f32 %v758, 0.0
    %v767 = vmax.f32 %v759, 0.0
    %v768 = vmax.f32 %v760, 0.0
    %v769 = vmax.f32 %v761, 0.0
    %v770 = vmax.f32 %v762, 0.0
    %v771 = vmax.f32 %v763, 0.0
    %v780 = vcombine.low %v764, %v765
    %v781 = vcombine.low %v766, %v767
    %v783 = vunpack.c.l.s4 1983009808
    %v784 = vunpack.c.0.s8 %v783
    %v785 = vlaneseq
    %v786 = vshrl.u32 %v785, 7
    %v787 = vsub.s32 %v784, %v786
    %v788 = vrot.slane %v780, %v787
    %v790 = vunpack.c.l.s4 1983009808
    %v791 = vunpack.c.0.s8 %v790
    %v792 = vlaneseq
    %v793 = vshrl.u32 %v792, 7
    %v794 = vsub.s32 %v791, %v793
    %v795 = vrot.slane %v781, %v794
    %v796 = vcombine.low %v788, %v795
    %v797 = vcombine.low %v768, %v769
    %v798 = vcombine.low %v770, %v771
    %v800 = vunpack.c.l.s4 1983009808
    %v801 = vunpack.c.0.s8 %v800
    %v802 = vlaneseq
    %v803 = vshrl.u32 %v802, 7
    %v804 = vsub.s32 %v801, %v803
    %v805 = vrot.slane %v797, %v804
    %v807 = vunpack.c.l.s4 1983009808
    %v808 = vunpack.c.0.s8 %v807
    %v809 = vlaneseq
    %v810 = vshrl.u32 %v809, 7
    %v811 = vsub.s32 %v808, %v810
    %v812 = vrot.slane %v798, %v811
    %v813 = vcombine.low %v805, %v812
    %816 = vst [vmem:[#allocation8] sm:$0xff] %v796
    %817 = vst [vmem:[#allocation8 + $0x8] sm:$0xff] %v813
    // Predicated region
    $region30: #{tpu_custom_call.1} parent=1 // pred_check
      _
    $region31: #{tpu_custom_call.1} parent=1 // pred_check_branch
      %819 = sbr.rel (0) target = $region33
    $region32: #{tpu_custom_call.1} parent=1 // pred_region
      %s821 = ssub.s32 256, 256
      %822 = vsyncadd [#allocation4], %s821
      %s824 = sshll.u32 [#allocation8], 4
      %s825 = int_to_ptr.vmem [resolvable:$true] %s824
      %827 = dma.vmem_to_hbm [thread:$0]  %s825, 256, %s4, [#allocation4]
    $region33: #{tpu_custom_call.1} parent=1 // pred_fallthru
      _
    // Predicated region
    $region34: #{tpu_custom_call.1} parent=1 // pred_check
      _
    $region35: #{tpu_custom_call.1} parent=1 // pred_check_branch
      %829 = sbr.rel (0) target = $region37
    $region36: #{tpu_custom_call.1} parent=1 // pred_region
      %830 = dma.done [#allocation4], 256
    $region37: #{tpu_custom_call.1} parent=1 // pred_fallthru
      _
    %831 = vsyncpa [#allocation3], 1
    %832 = vsyncpa [#allocation6], 1
    %833 = vsyncpa [#allocation4], 1

</llo_original>
